<compile_context>
chip_gen: v7x
topology: tpu7x:2x2x1
jax: 0.10.0
libtpu: 0.0.40
codegen_flags: <defaults>
</compile_context>

<pallas_src>
import jax
import jax.numpy as jnp
import numpy as np
from jax.experimental import pallas as pl
from jax.experimental.pallas import tpu as pltpu

_LANE = 128
_SUB = 8


def _sentinels(dtype):
    """Values that are neutral for min/max reductions in `dtype`."""
    if jnp.issubdtype(dtype, jnp.floating):
        return float("-inf"), float("inf")
    info = jnp.iinfo(dtype)
    return int(info.min), int(info.max)


def tensor_min_max(x, *, max_tile_rows=4096):
    """Whole-tensor (min, max) via a Pallas TPU streaming reduction.

    Returns two 0-d arrays of x.dtype.
    """
    x_flat = x.reshape(-1)
    n = x_flat.shape[0]

    # Lane/sublane-dense layout: pad to a multiple of 8*128 elements with a
    # REPLICATED real value (min/max unaffected).  For aligned sizes this is a
    # free reshape; the pad/copy only happens in the rare ragged case.
    chunk = _SUB * _LANE
    n_pad = ((n + chunk - 1) // chunk) * chunk
    if n_pad != n:
        pad = jnp.broadcast_to(x_flat[:1], (n_pad - n,))
        x_flat = jnp.concatenate([x_flat, pad])
    rows = n_pad // _LANE                       # multiple of 8
    y = x_flat.reshape(rows, _LANE)             # native dtype, no upcast

    tr = min(int(max_tile_rows), rows)          # both multiples of 8
    num_tiles = pl.cdiv(rows, tr)
    needs_mask = (rows % tr) != 0               # partial last tile -> mask

    # Megacore (v7x has 2 TensorCores): split the tile loop across a leading
    # "parallel" axis when the tile count divides evenly.  Harmless on v5e/v6e.
    n_par = 2 if (num_tiles >= 2 and num_tiles % 2 == 0) else 1
    k_per = num_tiles // n_par

    lo_s, hi_s = _sentinels(y.dtype)

    def kernel(y_ref, min_ref, max_ref):
        p = pl.program_id(0)
        k = pl.program_id(1)
        xt = y_ref[...]                         # (tr, 128) native dtype

        if needs_mask:
            g = p * k_per + k                   # global tile index
            ridx = jax.lax.broadcasted_iota(jnp.int32, (tr, _LANE), 0) + g * tr
            valid = ridx < rows
            x_for_min = jnp.where(valid, xt, jnp.array(hi_s, dtype=xt.dtype))
            x_for_max = jnp.where(valid, xt, jnp.array(lo_s, dtype=xt.dtype))
        else:
            x_for_min = xt
            x_for_max = xt

        # Per-step: cheap VPU reduce along sublanes into lane-dense (1, 128)
        # accumulators (the resident output blocks); fully hidden under DMA.
        tmin = jnp.min(x_for_min, axis=0, keepdims=True)   # (1, 128)
        tmax = jnp.max(x_for_max, axis=0, keepdims=True)   # (1, 128)

        @pl.when(k == 0)
        def _():
            min_ref[...] = tmin
            max_ref[...] = tmax

        @pl.when(k > 0)
        def _():
            min_ref[...] = jnp.minimum(min_ref[...], tmin)
            max_ref[...] = jnp.maximum(max_ref[...], tmax)

    min_parts, max_parts = pl.pallas_call(
        kernel,
        out_shape=(jax.ShapeDtypeStruct((n_par, 1, _LANE), y.dtype),
                   jax.ShapeDtypeStruct((n_par, 1, _LANE), y.dtype)),
        grid_spec=pltpu.PrefetchScalarGridSpec(
            num_scalar_prefetch=0,
            grid=(n_par, k_per),
            in_specs=[
                pl.BlockSpec((tr, _LANE), lambda p, k: (p * k_per + k, 0)),
            ],
            out_specs=[
                pl.BlockSpec((None, 1, _LANE), lambda p, k: (p, 0, 0)),
                pl.BlockSpec((None, 1, _LANE), lambda p, k: (p, 0, 0)),
            ],
        ),
        compiler_params=pltpu.CompilerParams(
            dimension_semantics=("parallel", "arbitrary"),
            vmem_limit_bytes=32 * 1024 * 1024),
    )(y)

    # Tiny final cross-lane / cross-chunk reduce in plain JAX (n_par*128 elems).
    return jnp.min(min_parts), jnp.max(max_parts)


class MinMaxObserver:
    """JAX/Pallas port of torch.quantization.observer.MinMaxObserver
    (defaults: dtype=quint8, qscheme=per_tensor_affine, reduce_range=False)."""

    def __init__(self, dtype="quint8", qscheme="per_tensor_affine",
                 reduce_range=False):
        assert dtype in ("quint8", "qint8")
        assert qscheme in ("per_tensor_affine", "per_tensor_symmetric")
        self.dtype = dtype
        self.qscheme = qscheme
        self.reduce_range = reduce_range
        self.eps = float(np.finfo(np.float32).eps)
        self.min_val = None   # corresponds to the empty registered buffer
        self.max_val = None

    def forward(self, x_orig):
        """Records the running minimum and maximum of ``x_orig``."""
        cur_min, cur_max = tensor_min_max(x_orig)
        # has_state is a Python-time property of the observer, so the merge
        # with the running state is two scalar ops in plain JAX (no kernel
        # flag / extra inputs needed).
        if self.min_val is None or self.max_val is None:
            self.min_val, self.max_val = cur_min, cur_max
        else:
            self.min_val = jnp.minimum(self.min_val, cur_min)
            self.max_val = jnp.maximum(self.max_val, cur_max)
        return x_orig  # observer returns its input unchanged

    def calculate_qparams(self):
        """Plain-JAX glue mirroring _ObserverBase._calculate_qparams."""
        if self.min_val is None or self.max_val is None:
            return jnp.array([1.0], jnp.float32), jnp.array([0], jnp.int32)
        if self.dtype == "qint8":
            qmin, qmax = (-64, 63) if self.reduce_range else (-128, 127)
        else:
            qmin, qmax = (0, 127) if self.reduce_range else (0, 255)
        min_v = jnp.minimum(self.min_val.astype(jnp.float32), 0.0)
        max_v = jnp.maximum(self.max_val.astype(jnp.float32), 0.0)
        same = max_v == min_v
        if self.qscheme == "per_tensor_symmetric":
            mx = jnp.maximum(-min_v, max_v)
            scale = jnp.maximum(mx / ((qmax - qmin) / 2), self.eps)
            zp = jnp.array(0.0 if self.dtype == "qint8" else 128.0, jnp.float32)
        else:
            scale = jnp.maximum((max_v - min_v) / float(qmax - qmin), self.eps)
            zp = jnp.clip(qmin - jnp.round(min_v / scale), qmin, qmax)
        scale = jnp.where(same, 1.0, scale)
        zp = jnp.where(same, 0.0, zp)
        # TODO(synk): PyTorch returns int64 zero_points; int32 used here since
        # jax x64 is disabled by default.
        return scale.reshape(1), zp.astype(jnp.int32).reshape(1)

    def get_qparams(self):
        return self.calculate_qparams()


if __name__ == "__main__":
    key = jax.random.PRNGKey(0)
    k1, k2, k3, k4 = jax.random.split(key, 4)

    # Main path: NCHW activations, two forward calls to exercise both the
    # "empty state" and "merge with running state" paths.
    x1 = jax.random.normal(k1, (2, 4, 16, 16), dtype=jnp.float32)
    x2 = jax.random.normal(k2, (2, 4, 16, 16), dtype=jnp.float32) * 2.0 + 0.5

    obs = MinMaxObserver()
    out1 = obs.forward(x1)
    out2 = obs.forward(x2)
    jax.block_until_ready((obs.min_val, obs.max_val, out2))

    ref_min = jnp.minimum(jnp.min(x1), jnp.min(x2))
    ref_max = jnp.maximum(jnp.max(x1), jnp.max(x2))
    np.testing.assert_allclose(np.asarray(obs.min_val), np.asarray(ref_min),
                               rtol=0, atol=0)
    np.testing.assert_allclose(np.asarray(obs.max_val), np.asarray(ref_max),
                               rtol=0, atol=0)
    np.testing.assert_array_equal(np.asarray(out2), np.asarray(x2))  # passthru

    # Multi-tile + partial-last-tile masking + 2-way parallel split.
    x3 = jax.random.normal(k3, (2, 4, 16, 24), dtype=jnp.float32)  # 24 rows
    m3, M3 = tensor_min_max(x3, max_tile_rows=16)
    np.testing.assert_allclose(np.asarray(m3), np.asarray(jnp.min(x3)), 0, 0)
    np.testing.assert_allclose(np.asarray(M3), np.asarray(jnp.max(x3)), 0, 0)

    # Ragged size (not a multiple of 1024) -> replicate-pad path.
    x4 = jax.random.normal(k4, (3, 5, 7), dtype=jnp.float32)
    m4, M4 = tensor_min_max(x4)
    np.testing.assert_allclose(np.asarray(m4), np.asarray(jnp.min(x4)), 0, 0)
    np.testing.assert_allclose(np.asarray(M4), np.asarray(jnp.max(x4)), 0, 0)

    # Native-dtype streaming (bf16, no f32 upcast of the streamed data).
    x5 = x1.astype(jnp.bfloat16)
    m5, M5 = tensor_min_max(x5)
    assert m5.dtype == jnp.bfloat16 and M5.dtype == jnp.bfloat16
    np.testing.assert_allclose(np.asarray(m5.astype(jnp.float32)),
                               np.asarray(jnp.min(x5).astype(jnp.float32)),
                               rtol=0, atol=0)
    np.testing.assert_allclose(np.asarray(M5.astype(jnp.float32)),
                               np.asarray(jnp.max(x5).astype(jnp.float32)),
                               rtol=0, atol=0)

    # qparams glue (not part of forward, provided for completeness).
    scales, zps = obs.get_qparams()
    jax.block_until_ready((scales, zps))

    print("KERNEL_OK")
</pallas_src>

<mosaic_0001>
module attributes {stable_mosaic.version = 11 : i64} {
  func.func @kernel(%arg0: i32, %arg1: i32, %arg2: memref<16x128xf32, #tpu.memory_space<vmem>>, %arg3: memref<1x1x128xf32, #tpu.memory_space<vmem>>, %arg4: memref<1x1x128xf32, #tpu.memory_space<vmem>>) attributes {dimension_semantics = [#tpu.dimension_semantics<parallel>, #tpu.dimension_semantics<arbitrary>], iteration_bounds = array<i64: 1, 1>, scalar_prefetch = 0 : i64, scratch_operands = 0 : i64, tpu.core_type = #tpu.core_type<tc>, window_params = [{transform_indices = @transform_0, window_bounds = array<i64: 16, 128>}, {transform_indices = @transform_1, window_bounds = array<i64: 1, 1, 128>}, {transform_indices = @transform_2, window_bounds = array<i64: 1, 1, 128>}]} {
    %c0 = arith.constant 0 : index
    %c0_0 = arith.constant 0 : index
    %0 = vector.load %arg2[%c0, %c0_0] : memref<16x128xf32, #tpu.memory_space<vmem>>, vector<16x128xf32>
    %cst = arith.constant dense<0x7F800000> : vector<128xf32>
    %1 = vector.multi_reduction <minimumf>, %0, %cst [0] : vector<16x128xf32> to vector<128xf32>
    %2 = vector.shape_cast %1 : vector<128xf32> to vector<1x128xf32>
    %cst_1 = arith.constant dense<0xFF800000> : vector<128xf32>
    %3 = vector.multi_reduction <maximumf>, %0, %cst_1 [0] : vector<16x128xf32> to vector<128xf32>
    %4 = vector.shape_cast %3 : vector<128xf32> to vector<1x128xf32>
    %c0_i32 = arith.constant 0 : i32
    %5 = arith.cmpi eq, %arg1, %c0_i32 : i32
    %6 = arith.extui %5 : i1 to i32
    %c0_i32_2 = arith.constant 0 : i32
    %7 = arith.cmpi ne, %6, %c0_i32_2 : i32
    scf.if %7 {
      %c0_5 = arith.constant 0 : index
      %c0_6 = arith.constant 0 : index
      %c0_7 = arith.constant 0 : index
      %11 = vector.load %arg3[%c0_5, %c0_6, %c0_7] : memref<1x1x128xf32, #tpu.memory_space<vmem>>, vector<1x1x128xf32>
      %12 = vector.shape_cast %11 : vector<1x1x128xf32> to vector<1x128xf32>
      %13 = vector.shape_cast %2 : vector<1x128xf32> to vector<1x1x128xf32>
      tpu.vector_store %arg3[%c0_5, %c0_6, %c0_7], %13 {strides = array<i32>} : memref<1x1x128xf32, #tpu.memory_space<vmem>>, vector<1x1x128xf32>,
      %c0_8 = arith.constant 0 : index
      %c0_9 = arith.constant 0 : index
      %c0_10 = arith.constant 0 : index
      %14 = vector.load %arg4[%c0_8, %c0_9, %c0_10] : memref<1x1x128xf32, #tpu.memory_space<vmem>>, vector<1x1x128xf32>
      %15 = vector.shape_cast %14 : vector<1x1x128xf32> to vector<1x128xf32>
      %16 = vector.shape_cast %4 : vector<1x128xf32> to vector<1x1x128xf32>
      tpu.vector_store %arg4[%c0_8, %c0_9, %c0_10], %16 {strides = array<i32>} : memref<1x1x128xf32, #tpu.memory_space<vmem>>, vector<1x1x128xf32>,
    } else {
    }
    %c0_i32_3 = arith.constant 0 : i32
    %8 = arith.cmpi sgt, %arg1, %c0_i32_3 : i32
    %9 = arith.extui %8 : i1 to i32
    %c0_i32_4 = arith.constant 0 : i32
    %10 = arith.cmpi ne, %9, %c0_i32_4 : i32
    scf.if %10 {
      %c0_5 = arith.constant 0 : index
      %c0_6 = arith.constant 0 : index
      %c0_7 = arith.constant 0 : index
      %11 = vector.load %arg3[%c0_5, %c0_6, %c0_7] : memref<1x1x128xf32, #tpu.memory_space<vmem>>, vector<1x1x128xf32>
      %12 = vector.shape_cast %11 : vector<1x1x128xf32> to vector<1x128xf32>
      %13 = arith.minimumf %12, %2 : vector<1x128xf32>
      %c0_8 = arith.constant 0 : index
      %c0_9 = arith.constant 0 : index
      %c0_10 = arith.constant 0 : index
      %14 = vector.load %arg3[%c0_8, %c0_9, %c0_10] : memref<1x1x128xf32, #tpu.memory_space<vmem>>, vector<1x1x128xf32>
      %15 = vector.shape_cast %14 : vector<1x1x128xf32> to vector<1x128xf32>
      %16 = vector.shape_cast %13 : vector<1x128xf32> to vector<1x1x128xf32>
      tpu.vector_store %arg3[%c0_8, %c0_9, %c0_10], %16 {strides = array<i32>} : memref<1x1x128xf32, #tpu.memory_space<vmem>>, vector<1x1x128xf32>,
      %c0_11 = arith.constant 0 : index
      %c0_12 = arith.constant 0 : index
      %c0_13 = arith.constant 0 : index
      %17 = vector.load %arg4[%c0_11, %c0_12, %c0_13] : memref<1x1x128xf32, #tpu.memory_space<vmem>>, vector<1x1x128xf32>
      %18 = vector.shape_cast %17 : vector<1x1x128xf32> to vector<1x128xf32>
      %19 = arith.maximumf %18, %4 : vector<1x128xf32>
      %c0_14 = arith.constant 0 : index
      %c0_15 = arith.constant 0 : index
      %c0_16 = arith.constant 0 : index
      %20 = vector.load %arg4[%c0_14, %c0_15, %c0_16] : memref<1x1x128xf32, #tpu.memory_space<vmem>>, vector<1x1x128xf32>
      %21 = vector.shape_cast %20 : vector<1x1x128xf32> to vector<1x128xf32>
      %22 = vector.shape_cast %19 : vector<1x128xf32> to vector<1x1x128xf32>
      tpu.vector_store %arg4[%c0_14, %c0_15, %c0_16], %22 {strides = array<i32>} : memref<1x1x128xf32, #tpu.memory_space<vmem>>, vector<1x1x128xf32>,
    } else {
    }
    return
  }
  func.func @transform_0(%arg0: i32, %arg1: i32) -> (i32, i32) {
    %c1_i32 = arith.constant 1 : i32
    %0 = arith.muli %arg0, %c1_i32 : i32
    %1 = arith.addi %0, %arg1 : i32
    %c0_i32 = arith.constant 0 : i32
    %c0_i32_0 = arith.constant 0 : i32
    return %1, %c0_i32 : i32, i32
  }
  func.func @transform_1(%arg0: i32, %arg1: i32) -> (i32, i32, i32) {
    %c0_i32 = arith.constant 0 : i32
    %c0_i32_0 = arith.constant 0 : i32
    %c0_i32_1 = arith.constant 0 : i32
    return %arg0, %c0_i32, %c0_i32_0 : i32, i32, i32
  }
  func.func @transform_2(%arg0: i32, %arg1: i32) -> (i32, i32, i32) {
    %c0_i32 = arith.constant 0 : i32
    %c0_i32_0 = arith.constant 0 : i32
    %c0_i32_1 = arith.constant 0 : i32
    return %arg0, %c0_i32, %c0_i32_0 : i32, i32, i32
  }
}

</mosaic_0001>

<llo_original>
// kernel: tpu_custom_call.1
$region0: #{tpu_custom_call.1}
  #allocation0 [shape = 'u32[]', space=smem, size = 0x4, offset = 0x4, fixed_abs, tag = 'smem constant byte address 0x4 - core index']
  #allocation1 [shape = 'u32[144,128]{1,0:T(1,128)}', space=vmem, size = 0x12000, scoped, tag = 'internal scratch']
  %s0 = inlined_call_operand.hbm [shape: f32[16,128], index: 0, kind: input, shape index: {}]
  %s1 = inlined_call_operand.hbm [shape: f32[1,1,128], index: 1, kind: output, shape index: {0}]
  %s2 = inlined_call_operand.hbm [shape: f32[1,1,128], index: 2, kind: output, shape index: {1}]
  %3 = xla_tuple %s1, %s2
  %s4 = sld [smem:[#allocation0]]
  $region34: #{tpu_custom_call.1} parent=0
    _
  %s6 = ssub.s32 1, %s4
  %s7 = scalar_select 0, %s6, %s4
  $region1: #{tpu_custom_call.1} parent=0
    #allocation2 [shape = 'u8[8192]{0}', space=vmem, size = 0x2000, scoped, tag = 'input window, operand 0, single buffered']
    #allocation3 [shape = 's32[1]{0}', space=sflag, size = 0x4, scoped, tag = 'scoped memory for tpu_custom_call.1']
    #allocation4 [shape = 's32[1]{0}', space=sflag, size = 0x4, scoped, tag = 'scoped memory for tpu_custom_call.1']
    #allocation5 [shape = 'u8[512]{0}', space=vmem, size = 0x400, scoped, tag = 'output window, operand 0, single buffered']
    #allocation6 [shape = 'u8[512]{0}', space=vmem, size = 0x400, scoped, tag = 'output window, operand 1, single buffered']
    #allocation7 [shape = 's32[1]{0}', space=sflag, size = 0x4, scoped, tag = 'scoped memory for tpu_custom_call.1']
    %8 = vsyncpa [#allocation3], 0
    %9 = vsyncpa [#allocation4], 0
    %10 = vsyncpa [#allocation7], 0
    // Predicated region
    $region2: #{tpu_custom_call.1} parent=1 // pred_check
      _
    $region3: #{tpu_custom_call.1} parent=1 // pred_check_branch
      %12 = sbr.rel (0) target = $region5
    $region4: #{tpu_custom_call.1} parent=1 // pred_region
      %s13 = sadd.s32 0, 0
      %s14 = smul.u32 2, %s13
      %s16 = ssub.s32 256, 256
      %17 = vsyncadd [#allocation3], %s16
      %s18 = smul.addr %s14, 128
      %s19 = scalar_lea.hbm %s0, %s18
      %s20 = sshll.u32 [#allocation2], 4
      %s21 = int_to_ptr.vmem [resolvable:$true] %s20
      %26 = dma.hbm_to_vmem [thread:$0]  %s19, 256, %s21, [#allocation3], 128, 128, 8
    $region5: #{tpu_custom_call.1} parent=1 // pred_fallthru
      _
    // Predicated region
    $region6: #{tpu_custom_call.1} parent=1 // pred_check
      _
    $region7: #{tpu_custom_call.1} parent=1 // pred_check_branch
      %28 = sbr.rel (0) target = $region9
    $region8: #{tpu_custom_call.1} parent=1 // pred_region
      %29 = dma.done [#allocation3], 256
    $region9: #{tpu_custom_call.1} parent=1 // pred_fallthru
      _
    %s30 = sadd.s32 0, 0
    %s31 = smul.u32 2, %s30
    %v32 = vld [vmem:[#allocation2] sm:$0xff]
    %v33 = vld [vmem:[#allocation2 + $0x8] sm:$0xff]
    %v34 = vmin.f32 %v32, %v33
    %v35 = vrot.slane %v34, 4
    %v36 = vmin.f32 %v34, %v35
    %v37 = vrot.slane %v36, 2
    %v38 = vmin.f32 %v36, %v37
    %v39 = vrot.slane %v38, 1
    %v40 = vmin.f32 %v38, %v39
    %v41 = vmax.f32 %v32, %v33
    %v42 = vrot.slane %v41, 4
    %v43 = vmax.f32 %v41, %v42
    %v44 = vrot.slane %v43, 2
    %v45 = vmax.f32 %v43, %v44
    %v46 = vrot.slane %v45, 1
    %v47 = vmax.f32 %v45, %v46
    %p48 = scmp.eq.s32.totalorder 0, 0
    // Predicated region
    $region10: #{tpu_custom_call.1} parent=1 // pred_check
      %p49 = pneg %p48
    $region11: #{tpu_custom_call.1} parent=1 // pred_check_branch
      %51 = sbr.rel (%p49) target = $region13
    $region12: #{tpu_custom_call.1} parent=1 // pred_region
      %52 = vst [vmem:[#allocation5] sm:$0x1] %v40
      %53 = vst [vmem:[#allocation6] sm:$0x1] %v47
    $region13: #{tpu_custom_call.1} parent=1 // pred_fallthru
      _
    %p54 = scmp.gt.s32.totalorder 0, 0
    // Predicated region
    $region14: #{tpu_custom_call.1} parent=1 // pred_check
      %p55 = pneg %p54
    $region15: #{tpu_custom_call.1} parent=1 // pred_check_branch
      %57 = sbr.rel (%p55) target = $region17
    $region16: #{tpu_custom_call.1} parent=1 // pred_region
      %v58 = vld [vmem:[#allocation5] sm:$0x1]
      %v59 = vmin.f32 %v58, %v40
      %60 = vst [vmem:[#allocation5] sm:$0x1] %v59
      %v61 = vld [vmem:[#allocation6] sm:$0x1]
      %v62 = vmax.f32 %v61, %v47
      %63 = vst [vmem:[#allocation6] sm:$0x1] %v62
    $region17: #{tpu_custom_call.1} parent=1 // pred_fallthru
      _
    // Predicated region
    $region18: #{tpu_custom_call.1} parent=1 // pred_check
      _
    $region19: #{tpu_custom_call.1} parent=1 // pred_check_branch
      %65 = sbr.rel (0) target = $region21
    $region20: #{tpu_custom_call.1} parent=1 // pred_region
      %s67 = ssub.s32 16, 16
      %68 = vsyncadd [#allocation4], %s67
      %s70 = sshll.u32 [#allocation5], 4
      %s71 = int_to_ptr.vmem [resolvable:$true] %s70
      %73 = dma.vmem_to_hbm [thread:$0]  %s71, 16, %s1, [#allocation4]
    $region21: #{tpu_custom_call.1} parent=1 // pred_fallthru
      _
    // Predicated region
    $region22: #{tpu_custom_call.1} parent=1 // pred_check
      _
    $region23: #{tpu_custom_call.1} parent=1 // pred_check_branch
      %75 = sbr.rel (0) target = $region25
    $region24: #{tpu_custom_call.1} parent=1 // pred_region
      %s77 = ssub.s32 16, 16
      %78 = vsyncadd [#allocation7], %s77
      %s80 = sshll.u32 [#allocation6], 4
      %s81 = int_to_ptr.vmem [resolvable:$true] %s80
      %83 = dma.vmem_to_hbm [thread:$0]  %s81, 16, %s2, [#allocation7]
    $region25: #{tpu_custom_call.1} parent=1 // pred_fallthru
      _
    // Predicated region
    $region26: #{tpu_custom_call.1} parent=1 // pred_check
      _
    $region27: #{tpu_custom_call.1} parent=1 // pred_check_branch
      %85 = sbr.rel (0) target = $region29
    $region28: #{tpu_custom_call.1} parent=1 // pred_region
      %86 = dma.done [#allocation4], 16
    $region29: #{tpu_custom_call.1} parent=1 // pred_fallthru
      _
    // Predicated region
    $region30: #{tpu_custom_call.1} parent=1 // pred_check
      _
    $region31: #{tpu_custom_call.1} parent=1 // pred_check_branch
      %88 = sbr.rel (0) target = $region33
    $region32: #{tpu_custom_call.1} parent=1 // pred_region
      %89 = dma.done [#allocation7], 16
    $region33: #{tpu_custom_call.1} parent=1 // pred_fallthru
      _
    %90 = vsyncpa [#allocation3], 1
    %91 = vsyncpa [#allocation4], 1
    %92 = vsyncpa [#allocation7], 1

</llo_original>
